<compile_context>
chip_gen: v7x
topology: tpu7x:2x2x1
jax: 0.10.0
libtpu: 0.0.40
codegen_flags: <defaults>
</compile_context>

<pallas_src>
import jax
import jax.numpy as jnp
from jax.experimental import pallas as pl
from jax.experimental.pallas import tpu as pltpu

EXPERTS = 5
EXPANSION = 4
BN_EPS = 1e-5
VMEM_BUDGET = 48 * 1024 * 1024   # fits every generation, incl. v7x's 64 MiB physical


def _round_up(v, m):
    return (v + m - 1) // m * m


def _pre_v6():
    # v5e and earlier: 128-wide MXU columns, no bf16 VALU -> keep tc=128 there.
    try:
        kind = jax.devices()[0].device_kind.lower()
        return any(t in kind for t in ("v2", "v3", "v4", "v5"))
    except Exception:
        return False


_PRE_V6 = _pre_v6()


# ---------------------------------------------------------------------------
# Pallas kernel: in-kernel expert aggregation + bf16 matmul + BN affine + ReLU
# ---------------------------------------------------------------------------
def _stage_body(att_ref, x_ref, w_ref, s_ref, b_ref, r_ref, o_ref, w_acc, *, have_res):
    n = pl.program_id(0)

    # Rebuild the per-sample aggregated weight for this (n, c-tile) on the first P tile;
    # it is then reused (bf16, in VMEM scratch) for all remaining P tiles.
    @pl.when(pl.program_id(2) == 0)
    def _():
        agg = att_ref[n, 0] * w_ref[0].astype(jnp.float32)
        for e in range(1, w_ref.shape[0]):
            agg = agg + att_ref[n, e] * w_ref[e].astype(jnp.float32)
        w_acc[...] = agg.astype(jnp.bfloat16)

    # bf16 MXU matmul, f32 accumulation.
    y = jnp.dot(x_ref[0], w_acc[...], preferred_element_type=jnp.float32)
    # Folded BatchNorm affine (+ f32 residual) + ReLU in f32; store bf16 (lane-dense).
    y = y * s_ref[...] + b_ref[...]
    if have_res:
        y = y + r_ref[0]
    o_ref[0] = jnp.maximum(y, 0.0).astype(o_ref.dtype)


def _stage_kernel(att_ref, x_ref, w_ref, s_ref, b_ref, o_ref, w_acc):
    _stage_body(att_ref, x_ref, w_ref, s_ref, b_ref, None, o_ref, w_acc, have_res=False)


def _stage_res_kernel(att_ref, x_ref, w_ref, s_ref, b_ref, r_ref, o_ref, w_acc):
    _stage_body(att_ref, x_ref, w_ref, s_ref, b_ref, r_ref, o_ref, w_acc, have_res=True)


# ---------------------------------------------------------------------------
# Tiling helpers
# ---------------------------------------------------------------------------
def _pick_tp(P):
    """Multiple of 16 (bf16 sublane packing); minimize P padding for large P."""
    p16 = _round_up(max(P, 16), 16)
    if p16 <= 512:
        return p16
    best_tp, best_pad = 512, _round_up(P, 512)
    for cand in (448, 384, 320, 256):
        pad = _round_up(P, cand)
        if pad < best_pad:
            best_tp, best_pad = cand, pad
    return best_tp


def _vmem_estimate(tp, tc, K_pad, E, have_res):
    x_blk = tp * K_pad * 2                       # bf16 x tile
    w_blk = E * K_pad * tc * 2                   # bf16 expert bank tile
    sb_blk = 2 * tc * 4                          # f32 scale + bias
    o_blk = tp * tc * 2                          # bf16 output tile
    r_blk = tp * tc * 4 if have_res else 0       # f32 residual tile
    scratch = K_pad * tc * 2                     # bf16 aggregated-weight scratch
    return 2 * (x_blk + w_blk + sb_blk + o_blk + r_blk) + scratch   # double-buffered


def _run_stage(att, x_cols, w_banks_bf16, scale, bias, residual=None):
    """att: (N,E) f32 routing; x_cols: (N,P,K) bf16; w_banks: (E,K,C) bf16;
    scale/bias: (C,) f32; residual: (N,P,C) f32 or None.
    Returns (N,P,C) bf16 = relu(bn(conv) [+ residual])."""
    N, P, K = x_cols.shape
    E = w_banks_bf16.shape[0]
    C = w_banks_bf16.shape[-1]
    have_res = residual is not None

    K_pad = _round_up(K, 128)
    C_pad = _round_up(C, 128)
    # Fill the 256-wide MXU on v6e/v7x; keep tc=128 on v5e (4x128x128 MXU).
    tc = 256 if (not _PRE_V6 and C_pad % 256 == 0) else 128
    tp = _pick_tp(P)
    # v7x VMEM re-budget: shrink tiles until the double-buffered working set fits.
    while _vmem_estimate(tp, tc, K_pad, E, have_res) > VMEM_BUDGET:
        if tp > 128:
            tp = max(128, tp // 2)
        elif tc > 128:
            tc = 128
        else:
            break
    C_pad = _round_up(C, tc)
    P_pad = _round_up(P, tp)
    est = _vmem_estimate(tp, tc, K_pad, E, have_res)
    vmem_limit = int(min(VMEM_BUDGET, max(8 << 20, est + est // 2)))

    # Zero-pad to (8,128)-aligned, lane-dense tiles (inputs already bf16 / f32).
    x_p = jnp.pad(x_cols, ((0, 0), (0, P_pad - P), (0, K_pad - K)))
    w_p = jnp.pad(w_banks_bf16, ((0, 0), (0, K_pad - K), (0, C_pad - C)))
    s_p = jnp.pad(scale, (0, C_pad - C)).reshape(1, C_pad).astype(jnp.float32)
    b_p = jnp.pad(bias, (0, C_pad - C)).reshape(1, C_pad).astype(jnp.float32)
    att = att.astype(jnp.float32)

    in_specs = [
        pl.BlockSpec((1, tp, K_pad), lambda n, c, p, att_r: (n, p, 0)),
        pl.BlockSpec((E, K_pad, tc), lambda n, c, p, att_r: (0, 0, c)),
        pl.BlockSpec((1, tc), lambda n, c, p, att_r: (0, c)),
        pl.BlockSpec((1, tc), lambda n, c, p, att_r: (0, c)),
    ]
    args = [x_p, w_p, s_p, b_p]
    if have_res:
        r_p = jnp.pad(residual.astype(jnp.float32),
                      ((0, 0), (0, P_pad - P), (0, C_pad - C)))
        in_specs.append(pl.BlockSpec((1, tp, tc), lambda n, c, p, att_r: (n, p, c)))
        args.append(r_p)
        kernel = _stage_res_kernel
    else:
        kernel = _stage_kernel

    out = pl.pallas_call(
        kernel,
        out_shape=jax.ShapeDtypeStruct((N, P_pad, C_pad), jnp.bfloat16),
        grid_spec=pltpu.PrefetchScalarGridSpec(
            num_scalar_prefetch=1,
            grid=(N, C_pad // tc, P_pad // tp),
            in_specs=in_specs,
            out_specs=pl.BlockSpec((1, tp, tc), lambda n, c, p, att_r: (n, p, c)),
            scratch_shapes=[pltpu.VMEM((K_pad, tc), jnp.bfloat16)],
        ),
        compiler_params=pltpu.CompilerParams(
            # N and C parallel (megacore on v7x; with small N, C tiles still feed the
            # second TensorCore); P is "arbitrary" because w_acc is cached across it.
            dimension_semantics=("parallel", "parallel", "arbitrary"),
            vmem_limit_bytes=vmem_limit,
        ),
    )(att, *args)
    return out[:, :P, :C]


# ---------------------------------------------------------------------------
# Glue (plain JAX): im2col (bf16), expert routing, parameter pre-transform
# ---------------------------------------------------------------------------
def _im2col(x_nhwc, k, stride, padding, dilation):
    """x_nhwc is bf16; columns stay bf16 (halves the 9x-inflated 3x3 column traffic)."""
    N, H, W, C = x_nhwc.shape
    if k == 1:
        xs = x_nhwc[:, ::stride, ::stride, :]
        Ho, Wo = xs.shape[1], xs.shape[2]
        return xs.reshape(N, Ho * Wo, C), Ho, Wo
    xp = jnp.pad(x_nhwc, ((0, 0), (padding, padding), (padding, padding), (0, 0)))
    Ho = (H + 2 * padding - dilation * (k - 1) - 1) // stride + 1
    Wo = (W + 2 * padding - dilation * (k - 1) - 1) // stride + 1
    patches = []
    for kh in range(k):
        for kw in range(k):
            h0, w0 = kh * dilation, kw * dilation
            patch = xp[:, h0:h0 + stride * (Ho - 1) + 1:stride,
                          w0:w0 + stride * (Wo - 1) + 1:stride, :]
            patches.append(patch)
    # (N, Ho, Wo, C, k*k) -> flatten C-major: idx = c*k*k + kh*k + kw
    cols = jnp.stack(patches, axis=-1).reshape(N, Ho * Wo, C * k * k)
    return cols, Ho, Wo


def _routing(x_nhwc, sp):
    """Per-sample expert routing: softmax(GAP(x) @ route.T + b) over the expert banks."""
    gap = jnp.mean(x_nhwc.astype(jnp.float32), axis=(1, 2))             # (N, Cin)
    return jax.nn.softmax(gap @ sp["route_w"].T + sp["route_b"], axis=-1)


def prepare_stage_params(conv_p, bn_p):
    """One-time transform: expert banks -> bf16 (E, Cin*k*k, Cout) (C-major K layout
    matching _im2col) and BatchNorm running stats folded into f32 scale/bias."""
    E, Co, Ci, kh, kw = conv_p["w"].shape
    banks = jnp.transpose(conv_p["w"].reshape(E, Co, Ci * kh * kw), (0, 2, 1))
    banks = banks.astype(jnp.bfloat16)
    inv = bn_p["gamma"] / jnp.sqrt(bn_p["running_var"] + BN_EPS)
    scale = inv.astype(jnp.float32)
    bias = (bn_p["beta"] - bn_p["running_mean"] * inv).astype(jnp.float32)
    return {"banks": banks, "scale": scale, "bias": bias,
            "route_w": conv_p["route_w"].astype(jnp.float32),
            "route_b": conv_p["route_b"].astype(jnp.float32)}


def prepare_bottleneck_params(params):
    return {
        "s1": prepare_stage_params(params["conv1"], params["bn1"]),
        "s2": prepare_stage_params(params["conv2"], params["bn2"]),
        "s3": prepare_stage_params(params["conv3"], params["bn3"]),
    }


def _ref_stage(att, cols, banks_bf16, scale, bias, residual=None):
    """Pure-JAX reference with the same bf16 rounding points as the Pallas path."""
    banks = banks_bf16.astype(jnp.float32)
    w_agg = jnp.einsum("ne,ekc->nkc", att, banks)
    w_agg = w_agg.astype(jnp.bfloat16).astype(jnp.float32)
    y = jnp.einsum("npk,nkc->npc", cols.astype(jnp.float32), w_agg)
    y = y * scale + bias
    if residual is not None:
        y = y + residual.astype(jnp.float32)
    return jnp.maximum(y, 0.0).astype(jnp.bfloat16)


# ---------------------------------------------------------------------------
# Bottleneck forward
# ---------------------------------------------------------------------------
def bottleneck_forward(x_nchw, prepared, *, stride=1, dilation=1, use_pallas=True):
    N, Cin, H, W = x_nchw.shape
    x_f32 = jnp.transpose(x_nchw, (0, 2, 3, 1)).astype(jnp.float32)     # NHWC f32
    x_bf = x_f32.astype(jnp.bfloat16)                                   # bf16 activations

    def stage(sp, x_nhwc_bf, k, st, pad, dil, residual=None):
        att = _routing(x_nhwc_bf, sp)
        cols, Ho, Wo = _im2col(x_nhwc_bf, k, st, pad, dil)
        if use_pallas:
            out = _run_stage(att, cols, sp["banks"], sp["scale"], sp["bias"], residual)
        else:
            out = _ref_stage(att, cols, sp["banks"], sp["scale"], sp["bias"], residual)
        C = sp["banks"].shape[-1]
        return out.reshape(N, Ho, Wo, C)                                # bf16 NHWC

    # conv1 (1x1) + bn1 + relu
    out = stage(prepared["s1"], x_bf, 1, 1, 0, 1)
    # conv2 (3x3, stride, dilation) + bn2 + relu
    out = stage(prepared["s2"], out, 3, stride, dilation, dilation)
    # conv3 (1x1) + bn3 + residual add (f32 identity) + relu
    # NOTE: downsample is None -> requires stride==1 and Cin == planes*EXPANSION.
    identity = x_f32.reshape(N, H * W, Cin)
    out = stage(prepared["s3"], out, 1, 1, 0, 1, residual=identity)
    return jnp.transpose(out, (0, 3, 1, 2)).astype(jnp.float32)         # NCHW f32


# ---------------------------------------------------------------------------
# Deterministic parameter init
# ---------------------------------------------------------------------------
def _conv_params(key, cin, cout, ks, experts=EXPERTS):
    k1, k2 = jax.random.split(key)
    return {
        "w": 0.1 * jax.random.normal(k1, (experts, cout, cin, ks, ks), jnp.float32),
        "route_w": 0.1 * jax.random.normal(k2, (experts, cin), jnp.float32),
        "route_b": jnp.zeros((experts,), jnp.float32),
    }


def _bn_params(key, c):
    k1, k2, k3 = jax.random.split(key, 3)
    return {
        "gamma": 1.0 + 0.1 * jax.random.normal(k1, (c,), jnp.float32),
        "beta": 0.1 * jax.random.normal(k2, (c,), jnp.float32),
        "running_mean": 0.1 * jax.random.normal(k3, (c,), jnp.float32),
        "running_var": jnp.ones((c,), jnp.float32),
    }


def init_bottleneck(key, inplanes, planes, groups=1, base_width=64):
    width = int(planes * (base_width / 64.0)) * groups
    cout = planes * EXPANSION
    ks = jax.random.split(key, 6)
    return {
        "conv1": _conv_params(ks[0], inplanes, width, 1),
        "bn1": _bn_params(ks[1], width),
        "conv2": _conv_params(ks[2], width, width, 3),
        "bn2": _bn_params(ks[3], width),
        "conv3": _conv_params(ks[4], width, cout, 1),
        "bn3": _bn_params(ks[5], cout),
    }


if __name__ == "__main__":
    key = jax.random.PRNGKey(0)
    k_param, k_x = jax.random.split(key)

    batch, planes, H, W = 2, 8, 8, 8
    inplanes = planes * EXPANSION   # 32, so downsample=None residual add is valid

    raw_params = init_bottleneck(k_param, inplanes, planes)
    params = prepare_bottleneck_params(raw_params)   # one-time bank transpose + BN fold
    x = jax.random.normal(k_x, (batch, inplanes, H, W), jnp.float32)

    out = jax.block_until_ready(
        bottleneck_forward(x, params, stride=1, dilation=1, use_pallas=True))

    # sanity check against a pure-JAX reference of the same forward pass
    ref = jax.block_until_ready(
        bottleneck_forward(x, params, stride=1, dilation=1, use_pallas=False))

    assert out.shape == (batch, inplanes, H, W)
    assert jnp.allclose(out, ref, rtol=2e-2, atol=2e-2), \
        float(jnp.max(jnp.abs(out - ref)))

    print("KERNEL_OK")
</pallas_src>

<mosaic_0001>
module attributes {stable_mosaic.version = 11 : i64} {
  func.func @_stage_kernel(%arg0: i32, %arg1: i32, %arg2: i32, %arg3: memref<2x5xf32, #tpu.memory_space<smem>>, %arg4: memref<1x64x128xbf16, #tpu.memory_space<vmem>>, %arg5: memref<5x128x128xbf16, #tpu.memory_space<vmem>>, %arg6: memref<1x128xf32, #tpu.memory_space<vmem>>, %arg7: memref<1x128xf32, #tpu.memory_space<vmem>>, %arg8: memref<1x64x128xbf16, #tpu.memory_space<vmem>>, %arg9: memref<128x128xbf16, #tpu.memory_space<vmem>>) attributes {dimension_semantics = [#tpu.dimension_semantics<parallel>, #tpu.dimension_semantics<parallel>, #tpu.dimension_semantics<arbitrary>], iteration_bounds = array<i64: 2, 1, 1>, scalar_prefetch = 1 : i64, scratch_operands = 1 : i64, tpu.core_type = #tpu.core_type<tc>, window_params = [{transform_indices = @transform_0, window_bounds = array<i64: 1, 64, 128>}, {transform_indices = @transform_1, window_bounds = array<i64: 5, 128, 128>}, {transform_indices = @transform_2, window_bounds = array<i64: 1, 128>}, {transform_indices = @transform_3, window_bounds = array<i64: 1, 128>}, {transform_indices = @transform_4, window_bounds = array<i64: 1, 64, 128>}]} {
    %c0_i32 = arith.constant 0 : i32
    %0 = arith.cmpi eq, %arg2, %c0_i32 : i32
    %1 = arith.extui %0 : i1 to i32
    %c0_i32_0 = arith.constant 0 : i32
    %2 = arith.cmpi ne, %1, %c0_i32_0 : i32
    scf.if %2 {
      %19 = arith.index_cast %arg0 : i32 to index
      %c0_13 = arith.constant 0 : index
      %20 = memref.load %arg3[%19, %c0_13] : memref<2x5xf32, #tpu.memory_space<smem>>
      %c0_14 = arith.constant 0 : index
      %c0_15 = arith.constant 0 : index
      %c0_16 = arith.constant 0 : index
      %21 = vector.load %arg5[%c0_14, %c0_15, %c0_16] : memref<5x128x128xbf16, #tpu.memory_space<vmem>>, vector<1x128x128xbf16>
      %22 = vector.shape_cast %21 : vector<1x128x128xbf16> to vector<128x128xbf16>
      %23 = arith.extf %22 : vector<128x128xbf16> to vector<128x128xf32>
      %24 = vector.broadcast %20 : f32 to vector<128x128xf32>
      %25 = arith.mulf %24, %23 : vector<128x128xf32>
      %26 = arith.index_cast %arg0 : i32 to index
      %c1 = arith.constant 1 : index
      %27 = memref.load %arg3[%26, %c1] : memref<2x5xf32, #tpu.memory_space<smem>>
      %c1_17 = arith.constant 1 : index
      %c0_18 = arith.constant 0 : index
      %c0_19 = arith.constant 0 : index
      %28 = vector.load %arg5[%c1_17, %c0_18, %c0_19] : memref<5x128x128xbf16, #tpu.memory_space<vmem>>, vector<1x128x128xbf16>
      %29 = vector.shape_cast %28 : vector<1x128x128xbf16> to vector<128x128xbf16>
      %30 = arith.extf %29 : vector<128x128xbf16> to vector<128x128xf32>
      %31 = vector.broadcast %27 : f32 to vector<128x128xf32>
      %32 = arith.mulf %31, %30 : vector<128x128xf32>
      %33 = arith.addf %25, %32 : vector<128x128xf32>
      %34 = arith.index_cast %arg0 : i32 to index
      %c2 = arith.constant 2 : index
      %35 = memref.load %arg3[%34, %c2] : memref<2x5xf32, #tpu.memory_space<smem>>
      %c2_20 = arith.constant 2 : index
      %c0_21 = arith.constant 0 : index
      %c0_22 = arith.constant 0 : index
      %36 = vector.load %arg5[%c2_20, %c0_21, %c0_22] : memref<5x128x128xbf16, #tpu.memory_space<vmem>>, vector<1x128x128xbf16>
      %37 = vector.shape_cast %36 : vector<1x128x128xbf16> to vector<128x128xbf16>
      %38 = arith.extf %37 : vector<128x128xbf16> to vector<128x128xf32>
      %39 = vector.broadcast %35 : f32 to vector<128x128xf32>
      %40 = arith.mulf %39, %38 : vector<128x128xf32>
      %41 = arith.addf %33, %40 : vector<128x128xf32>
      %42 = arith.index_cast %arg0 : i32 to index
      %c3 = arith.constant 3 : index
      %43 = memref.load %arg3[%42, %c3] : memref<2x5xf32, #tpu.memory_space<smem>>
      %c3_23 = arith.constant 3 : index
      %c0_24 = arith.constant 0 : index
      %c0_25 = arith.constant 0 : index
      %44 = vector.load %arg5[%c3_23, %c0_24, %c0_25] : memref<5x128x128xbf16, #tpu.memory_space<vmem>>, vector<1x128x128xbf16>
      %45 = vector.shape_cast %44 : vector<1x128x128xbf16> to vector<128x128xbf16>
      %46 = arith.extf %45 : vector<128x128xbf16> to vector<128x128xf32>
      %47 = vector.broadcast %43 : f32 to vector<128x128xf32>
      %48 = arith.mulf %47, %46 : vector<128x128xf32>
      %49 = arith.addf %41, %48 : vector<128x128xf32>
      %50 = arith.index_cast %arg0 : i32 to index
      %c4 = arith.constant 4 : index
      %51 = memref.load %arg3[%50, %c4] : memref<2x5xf32, #tpu.memory_space<smem>>
      %c4_26 = arith.constant 4 : index
      %c0_27 = arith.constant 0 : index
      %c0_28 = arith.constant 0 : index
      %52 = vector.load %arg5[%c4_26, %c0_27, %c0_28] : memref<5x128x128xbf16, #tpu.memory_space<vmem>>, vector<1x128x128xbf16>
      %53 = vector.shape_cast %52 : vector<1x128x128xbf16> to vector<128x128xbf16>
      %54 = arith.extf %53 : vector<128x128xbf16> to vector<128x128xf32>
      %55 = vector.broadcast %51 : f32 to vector<128x128xf32>
      %56 = arith.mulf %55, %54 : vector<128x128xf32>
      %57 = arith.addf %49, %56 : vector<128x128xf32>
      %58 = arith.truncf %57 : vector<128x128xf32> to vector<128x128xbf16>
      %c0_29 = arith.constant 0 : index
      %c0_30 = arith.constant 0 : index
      %59 = vector.load %arg9[%c0_29, %c0_30] : memref<128x128xbf16, #tpu.memory_space<vmem>>, vector<128x128xbf16>
      tpu.vector_store %arg9[%c0_29, %c0_30], %58 {strides = array<i32>} : memref<128x128xbf16, #tpu.memory_space<vmem>>, vector<128x128xbf16>,
    } else {
    }
    %c0 = arith.constant 0 : index
    %c0_1 = arith.constant 0 : index
    %c0_2 = arith.constant 0 : index
    %3 = vector.load %arg4[%c0, %c0_1, %c0_2] : memref<1x64x128xbf16, #tpu.memory_space<vmem>>, vector<1x64x128xbf16>
    %4 = vector.shape_cast %3 : vector<1x64x128xbf16> to vector<64x128xbf16>
    %c0_3 = arith.constant 0 : index
    %c0_4 = arith.constant 0 : index
    %5 = vector.load %arg9[%c0_3, %c0_4] : memref<128x128xbf16, #tpu.memory_space<vmem>>, vector<128x128xbf16>
    %cst = arith.constant dense<0.000000e+00> : vector<64x128xf32>
    %6 = tpu.matmul %4, %5, %cst {dimension_numbers = #tpu.dot_dimension_numbers<[1], [0], [0], [1], [0, 0, 1, 1], [], []>} : vector<64x128xbf16>, vector<128x128xbf16>, vector<64x128xf32> -> vector<64x128xf32>
    %c0_5 = arith.constant 0 : index
    %c0_6 = arith.constant 0 : index
    %7 = vector.load %arg6[%c0_5, %c0_6] : memref<1x128xf32, #tpu.memory_space<vmem>>, vector<1x128xf32>
    %8 = vector.broadcast %7 : vector<1x128xf32> to vector<64x128xf32>
    %9 = arith.mulf %6, %8 : vector<64x128xf32>
    %c0_7 = arith.constant 0 : index
    %c0_8 = arith.constant 0 : index
    %10 = vector.load %arg7[%c0_7, %c0_8] : memref<1x128xf32, #tpu.memory_space<vmem>>, vector<1x128xf32>
    %11 = vector.broadcast %10 : vector<1x128xf32> to vector<64x128xf32>
    %12 = arith.addf %9, %11 : vector<64x128xf32>
    %cst_9 = arith.constant 0.000000e+00 : f32
    %13 = vector.broadcast %cst_9 : f32 to vector<64x128xf32>
    %14 = arith.maximumf %12, %13 : vector<64x128xf32>
    %15 = arith.truncf %14 : vector<64x128xf32> to vector<64x128xbf16>
    %c0_10 = arith.constant 0 : index
    %c0_11 = arith.constant 0 : index
    %c0_12 = arith.constant 0 : index
    %16 = vector.load %arg8[%c0_10, %c0_11, %c0_12] : memref<1x64x128xbf16, #tpu.memory_space<vmem>>, vector<1x64x128xbf16>
    %17 = vector.shape_cast %16 : vector<1x64x128xbf16> to vector<64x128xbf16>
    %18 = vector.shape_cast %15 : vector<64x128xbf16> to vector<1x64x128xbf16>
    tpu.vector_store %arg8[%c0_10, %c0_11, %c0_12], %18 {strides = array<i32>} : memref<1x64x128xbf16, #tpu.memory_space<vmem>>, vector<1x64x128xbf16>,
    return
  }
  func.func @transform_0(%arg0: i32, %arg1: i32, %arg2: i32, %arg3: memref<2x5xf32, #tpu.memory_space<smem>>) -> (i32, i32, i32) {
    %c0_i32 = arith.constant 0 : i32
    %c0_i32_0 = arith.constant 0 : i32
    return %arg0, %arg2, %c0_i32 : i32, i32, i32
  }
  func.func @transform_1(%arg0: i32, %arg1: i32, %arg2: i32, %arg3: memref<2x5xf32, #tpu.memory_space<smem>>) -> (i32, i32, i32) {
    %c0_i32 = arith.constant 0 : i32
    %c0_i32_0 = arith.constant 0 : i32
    %c0_i32_1 = arith.constant 0 : i32
    return %c0_i32, %c0_i32_0, %arg1 : i32, i32, i32
  }
  func.func @transform_2(%arg0: i32, %arg1: i32, %arg2: i32, %arg3: memref<2x5xf32, #tpu.memory_space<smem>>) -> (i32, i32) {
    %c0_i32 = arith.constant 0 : i32
    %c0_i32_0 = arith.constant 0 : i32
    return %c0_i32, %arg1 : i32, i32
  }
  func.func @transform_3(%arg0: i32, %arg1: i32, %arg2: i32, %arg3: memref<2x5xf32, #tpu.memory_space<smem>>) -> (i32, i32) {
    %c0_i32 = arith.constant 0 : i32
    %c0_i32_0 = arith.constant 0 : i32
    return %c0_i32, %arg1 : i32, i32
  }
  func.func @transform_4(%arg0: i32, %arg1: i32, %arg2: i32, %arg3: memref<2x5xf32, #tpu.memory_space<smem>>) -> (i32, i32, i32) {
    %c0_i32 = arith.constant 0 : i32
    return %arg0, %arg2, %arg1 : i32, i32, i32
  }
}

</mosaic_0001>

<llo_original>
// kernel: tpu_custom_call.1
$region0: #{tpu_custom_call.1}
  #allocation0 [shape = 'u32[]', space=smem, size = 0x4, offset = 0x4, fixed_abs, tag = 'smem constant byte address 0x4 - core index']
  #allocation1 [shape = 'u32[144,128]{1,0:T(1,128)}', space=vmem, size = 0x12000, scoped, tag = 'internal scratch']
  #allocation2 [shape = 'bf16[128,128]{1,0:T(16,128)(2,1)}', space=vmem, size = 0x8000, scoped, tag = 'scratch operand']
  #allocation3 [shape = 's32[1]{0}', space=sflag, size = 0x4, scoped, tag = 'scoped memory for tpu_custom_call.1']
  #allocation4 [shape = 'u8[1024]{0}', space=smem, size = 0x400, scoped, tag = 'prefetched SMEM operand 0']
  %s0 = inlined_call_operand.hbm [shape: f32[2,5], index: 0, kind: input, shape index: {}]
  %s1 = inlined_call_operand.hbm [shape: bf16[2,64,128], index: 1, kind: input, shape index: {}]
  %s2 = inlined_call_operand.hbm [shape: bf16[5,128,128], index: 2, kind: input, shape index: {}]
  %s3 = inlined_call_operand.vmem [shape: f32[1,128], index: 3, kind: input, shape index: {}]
  %s4 = inlined_call_operand.vmem [shape: f32[1,128], index: 4, kind: input, shape index: {}]
  %s5 = inlined_call_operand.hbm [shape: bf16[2,64,128], index: 5, kind: output, shape index: {}]
  %s6 = sld [smem:[#allocation0]]
  $region61: #{tpu_custom_call.1} parent=0
    _
  %s8 = ssub.s32 1, %s6
  %s9 = scalar_select 0, %s8, %s6
  %11 = dma.hbm_to_smem %s0, 32, [#allocation4], [#allocation3]
  %12 = dma.done [#allocation3], 32
  %13 = sfence
  $region1: #{tpu_custom_call.1} parent=0
    #allocation5 [shape = 'u8[32768]{0}', space=vmem, size = 0x8000, scoped, tag = 'input window, operand 1']
    #allocation6 [shape = 's32[2]{0}', space=sflag, size = 0x8, scoped, tag = 'scoped memory for tpu_custom_call.1']
    #allocation7 [shape = 's32[2]{0}', space=sflag, size = 0x8, scoped, tag = 'scoped memory for tpu_custom_call.1']
    #allocation8 [shape = 'u8[163840]{0}', space=vmem, size = 0x28000, scoped, tag = 'input window, operand 2, single buffered']
    #allocation9 [shape = 's32[1]{0}', space=sflag, size = 0x4, scoped, tag = 'scoped memory for tpu_custom_call.1']
    #allocation10 [shape = 'u8[32768]{0}', space=vmem, size = 0x8000, scoped, tag = 'output window, operand 0']
    %14 = vsyncpa [#allocation6], 0
    %s15 = scalar_lea.sflag [#allocation6], 1
    %16 = vsyncpa %s15, 0
    %17 = vsyncpa [#allocation9], 0
    %18 = vsyncpa [#allocation7], 0
    %s19 = scalar_lea.sflag [#allocation7], 1
    %20 = vsyncpa %s19, 0
    loop: start=0, step=1, limit=4
    $region2: #{tpu_custom_call.1} parent=1 // loop_pre_header
      _
    $region3: #{tpu_custom_call.1} parent=1 // loop_header
      %s22 = sphi 0, %s26
      %p23 = scmp.ge.s32.totalorder %s22, 4
      %s29 = sphi 0, %s48
      %s30 = sphi 0, %s44
      %s31 = sphi 0, %s40
      %s32 = sphi 0, %s29
      %s33 = sphi 0, %s30
      %s34 = sphi 0, %s31
      %s35 = sphi 0, %s32
      %s36 = sphi 0, %s33
      %s37 = sphi 0, %s34
      %s53 = sphi 0, %s55
      %s56 = sphi 0, %s53
      %s57 = sphi 0, %s56
      %s73 = sphi 0, %s57
      %s79 = sphi 0, %s81
      %s82 = sphi 0, %s79
      %s83 = sphi 0, %s82
      %s99 = sphi 0, %s83
      %s105 = sphi 0, %s107
      %s108 = sphi 0, %s105
      %s109 = sphi 0, %s108
      %s125 = sphi 0, %s109
      %s131 = sphi 0, %s133
      %s134 = sphi 0, %s131
      %s135 = sphi 0, %s134
      %s151 = sphi 0, %s135
      %s161 = sphi 0, %s163
      %s164 = sphi 0, %s161
      %s165 = sphi 0, %s164
      %s181 = sphi 0, %s165
    $region4: #{tpu_custom_call.1} parent=1 // loop_header_branch
      %25 = sbr.rel (%p23) target = $region8
    $region5: #{tpu_custom_call.1} parent=1 // loop_body
      %s27 = ssub.s32 %s22, 1
      %s28 = ssub.s32 %s22, 2
      %s38 = sadd.s32 1, %s31
      %p39 = scmp.ge.s32.totalorder %s38, 1
      %s40 = scalar_select %p39, 0, %s38
      %s41 = sadd.s32 1, %s30
      %s42 = scalar_select %p39, %s41, %s30
      %p43 = scmp.ge.s32.totalorder %s42, 1
      %s44 = scalar_select %p43, 0, %s42
      %s45 = sadd.s32 1, %s29
      %s46 = scalar_select %p43, %s45, %s29
      %p47 = scmp.ge.s32.totalorder %s46, 2
      %s48 = scalar_select %p47, 0, %s46
      %s49 = ssub.s32 %s29, %s48
      %s50 = ssub.s32 %s31, %s40
      %s51 = sor.u32 %s49, %s50
      %p52 = scmp.eq.s32.totalorder %s51, 0
      %s54 = sadd.s32 %s53, 1
      %s55 = scalar_select %p52, %s53, %s54
      %p58 = pneg %p52
      %p59 = scmp.eq.s32.totalorder %s22, 1
      %p60 = por %p58, %p59
      %p61 = scmp.ne.s32.totalorder %s53, %s56
      %p62 = scmp.eq.s32.totalorder %s22, 0
      %p63 = por %p61, %p62
      %p64 = scmp.ne.s32.totalorder %s53, %s56
      %p65 = scmp.eq.s32.totalorder %s27, 1
      %p66 = por %p64, %p65
      %p67 = scmp.ne.s32.totalorder %s56, %s57
      %p68 = scmp.eq.s32.totalorder %s27, 0
      %p69 = por %p67, %p68
      %p70 = scmp.ne.s32.totalorder %s56, %s57
      %p71 = scmp.eq.s32.totalorder %s28, 1
      %p72 = por %p70, %p71
      %p74 = scmp.ne.s32.totalorder %s57, %s73
      %p75 = scmp.eq.s32.totalorder %s28, 0
      %p76 = por %p74, %p75
      %s77 = ssub.s32 %s30, %s44
      %p78 = scmp.eq.s32.totalorder %s77, 0
      %s80 = sadd.s32 %s79, 1
      %s81 = scalar_select %p78, %s79, %s80
      %p84 = pneg %p78
      %p85 = scmp.eq.s32.totalorder %s22, 1
      %p86 = por %p84, %p85
      %p87 = scmp.ne.s32.totalorder %s79, %s82
      %p88 = scmp.eq.s32.totalorder %s22, 0
      %p89 = por %p87, %p88
      %p90 = scmp.ne.s32.totalorder %s79, %s82
      %p91 = scmp.eq.s32.totalorder %s27, 1
      %p92 = por %p90, %p91
      %p93 = scmp.ne.s32.totalorder %s82, %s83
      %p94 = scmp.eq.s32.totalorder %s27, 0
      %p95 = por %p93, %p94
      %p96 = scmp.ne.s32.totalorder %s82, %s83
      %p97 = scmp.eq.s32.totalorder %s28, 1
      %p98 = por %p96, %p97
      %p100 = scmp.ne.s32.totalorder %s83, %s99
      %p101 = scmp.eq.s32.totalorder %s28, 0
      %p102 = por %p100, %p101
      %s103 = ssub.s32 %s30, %s44
      %p104 = scmp.eq.s32.totalorder %s103, 0
      %s106 = sadd.s32 %s105, 1
      %s107 = scalar_select %p104, %s105, %s106
      %p110 = pneg %p104
      %p111 = scmp.eq.s32.totalorder %s22, 1
      %p112 = por %p110, %p111
      %p113 = scmp.ne.s32.totalorder %s105, %s108
      %p114 = scmp.eq.s32.totalorder %s22, 0
      %p115 = por %p113, %p114
      %p116 = scmp.ne.s32.totalorder %s105, %s108
      %p117 = scmp.eq.s32.totalorder %s27, 1
      %p118 = por %p116, %p117
      %p119 = scmp.ne.s32.totalorder %s108, %s109
      %p120 = scmp.eq.s32.totalorder %s27, 0
      %p121 = por %p119, %p120
      %p122 = scmp.ne.s32.totalorder %s108, %s109
      %p123 = scmp.eq.s32.totalorder %s28, 1
      %p124 = por %p122, %p123
      %p126 = scmp.ne.s32.totalorder %s109, %s125
      %p127 = scmp.eq.s32.totalorder %s28, 0
      %p128 = por %p126, %p127
      %s129 = ssub.s32 %s30, %s44
      %p130 = scmp.eq.s32.totalorder %s129, 0
      %s132 = sadd.s32 %s131, 1
      %s133 = scalar_select %p130, %s131, %s132
      %p136 = pneg %p130
      %p137 = scmp.eq.s32.totalorder %s22, 1
      %p138 = por %p136, %p137
      %p139 = scmp.ne.s32.totalorder %s131, %s134
      %p140 = scmp.eq.s32.totalorder %s22, 0
      %p141 = por %p139, %p140
      %p142 = scmp.ne.s32.totalorder %s131, %s134
      %p143 = scmp.eq.s32.totalorder %s27, 1
      %p144 = por %p142, %p143
      %p145 = scmp.ne.s32.totalorder %s134, %s135
      %p146 = scmp.eq.s32.totalorder %s27, 0
      %p147 = por %p145, %p146
      %p148 = scmp.ne.s32.totalorder %s134, %s135
      %p149 = scmp.eq.s32.totalorder %s28, 1
      %p150 = por %p148, %p149
      %p152 = scmp.ne.s32.totalorder %s135, %s151
      %p153 = scmp.eq.s32.totalorder %s28, 0
      %p154 = por %p152, %p153
      %s155 = ssub.s32 %s29, %s48
      %s156 = ssub.s32 %s31, %s40
      %s157 = sor.u32 %s155, %s156
      %s158 = ssub.s32 %s30, %s44
      %s159 = sor.u32 %s157, %s158
      %p160 = scmp.eq.s32.totalorder %s159, 0
      %s162 = sadd.s32 %s161, 1
      %s163 = scalar_select %p160, %s161, %s162
      %p166 = pneg %p160
      %p167 = scmp.eq.s32.totalorder %s22, 1
      %p168 = por %p166, %p167
      %p169 = scmp.ne.s32.totalorder %s161, %s164
      %p170 = scmp.eq.s32.totalorder %s22, 0
      %p171 = por %p169, %p170
      %p172 = scmp.ne.s32.totalorder %s161, %s164
      %p173 = scmp.eq.s32.totalorder %s27, 1
      %p174 = por %p172, %p173
      %p175 = scmp.ne.s32.totalorder %s164, %s165
      %p176 = scmp.eq.s32.totalorder %s27, 0
      %p177 = por %p175, %p176
      %p178 = scmp.ne.s32.totalorder %s164, %s165
      %p179 = scmp.eq.s32.totalorder %s28, 1
      %p180 = por %p178, %p179
      %p182 = scmp.ne.s32.totalorder %s165, %s181
      %p183 = scmp.eq.s32.totalorder %s28, 0
      %p184 = por %p182, %p183
      %p185 = scmp.le.s32.totalorder 1, %s22
      %p186 = scmp.lt.s32.totalorder %s22, 3
      %p187 = pnand %p185, %p186
      %p188 = pneg %p187
      // Predicated region
      $region9: #{tpu_custom_call.1} parent=5 // pred_check
        _
      $region10: #{tpu_custom_call.1} parent=5 // pred_check_branch
        %190 = sbr.rel (%p187) target = $region12
      $region11: #{tpu_custom_call.1} parent=5 // pred_region
        %s191 = ssub.s32 %s22, 1
        // Predicated region
        $region13: #{tpu_custom_call.1} parent=11 // pred_check
          %p192 = pneg %p95
        $region14: #{tpu_custom_call.1} parent=11 // pred_check_branch
          %194 = sbr.rel (%p192) target = $region16
        $region15: #{tpu_custom_call.1} parent=11 // pred_region
          %s196 = ssub.s32 5120, 5120
          %197 = vsyncadd [#allocation9], %s196
          %s198 = smul.addr %s33, 64
          %s199 = scalar_lea.hbm %s2, %s198
          %s200 = sshll.u32 [#allocation8], 4
          %s201 = int_to_ptr.vmem [resolvable:$true] %s200
          %206 = dma.hbm_to_vmem [thread:$0]  %s199, 5120, %s201, [#allocation9], 64, 64, 4
        $region16: #{tpu_custom_call.1} parent=11 // pred_fallthru
          _
        // Predicated region
        $region17: #{tpu_custom_call.1} parent=11 // pred_check
          %p207 = pneg %p121
        $region18: #{tpu_custom_call.1} parent=11 // pred_check_branch
          %209 = sbr.rel (%p207) target = $region20
        $region19: #{tpu_custom_call.1} parent=11 // pred_region
          %p210 = scmp.lt.s32.totalorder %s33, 0
          %s211 = scalar_select %p210, %s33, 0
          %s212 = scalar_lea.vmem %s3, %s211
        $region20: #{tpu_custom_call.1} parent=11 // pred_fallthru
          _
        // Predicated region
        $region21: #{tpu_custom_call.1} parent=11 // pred_check
          %p213 = pneg %p147
        $region22: #{tpu_custom_call.1} parent=11 // pred_check_branch
          %215 = sbr.rel (%p213) target = $region24
        $region23: #{tpu_custom_call.1} parent=11 // pred_region
          %p216 = scmp.lt.s32.totalorder %s33, 0
          %s217 = scalar_select %p216, %s33, 0
          %s218 = scalar_lea.vmem %s4, %s217
        $region24: #{tpu_custom_call.1} parent=11 // pred_fallthru
          _
      $region12: #{tpu_custom_call.1} parent=5 // pred_fallthru
        _
      %p219 = scmp.lt.s32.totalorder %s22, 2
      // Predicated region
      $region25: #{tpu_custom_call.1} parent=5 // pred_check
        %p220 = pneg %p219
      $region26: #{tpu_custom_call.1} parent=5 // pred_check_branch
        %222 = sbr.rel (%p220) target = $region28
      $region27: #{tpu_custom_call.1} parent=5 // pred_region
        // Predicated region
        $region29: #{tpu_custom_call.1} parent=27 // pred_check
          %p223 = pneg %p63
        $region30: #{tpu_custom_call.1} parent=27 // pred_check_branch
          %225 = sbr.rel (%p223) target = $region32
        $region31: #{tpu_custom_call.1} parent=27 // pred_region
          %s226 = sand.u32 %s53, 1
          %s227 = scalar_lea.sflag [#allocation6], %s226
          %s228 = sand.u32 %s53, 1
          %s229 = smul.addr %s228, 32
          %s230 = scalar_lea.vmem [#allocation5], %s229
          %s231 = smul.u32 8, %s31
          %s233 = ssub.s32 512, 512
          %234 = vsyncadd %s227, %s233
          %s235 = smul.addr %s29, 8
          %s236 = sadd.s32 %s231, %s235
          %s237 = smul.addr %s236, 64
          %s238 = scalar_lea.hbm %s1, %s237
          %s239 = sshll.u32 %s230, 4
          %s240 = int_to_ptr.vmem [resolvable:$true] %s239
          %245 = dma.hbm_to_vmem [thread:$0]  %s238, 512, %s240, %s227, 64, 64, 4
        $region32: #{tpu_custom_call.1} parent=27 // pred_fallthru
          _
      $region28: #{tpu_custom_call.1} parent=5 // pred_fallthru
        _
      %p246 = scmp.le.s32.totalorder 1, %s22
      %p247 = scmp.lt.s32.totalorder %s22, 3
      %p248 = pnand %p246, %p247
      %p249 = pneg %p248
      // Predicated region
      $region33: #{tpu_custom_call.1} parent=5 // pred_check
        _
      $region34: #{tpu_custom_call.1} parent=5 // pred_check_branch
        %251 = sbr.rel (%p248) target = $region36
      $region35: #{tpu_custom_call.1} parent=5 // pred_region
        %s252 = ssub.s32 %s22, 1
        %s253 = sand.u32 %s56, 1
        %s254 = scalar_lea.sflag [#allocation6], %s253
        %s255 = sand.u32 %s56, 1
        %s256 = smul.addr %s255, 32
        %s257 = scalar_lea.vmem [#allocation5], %s256
        // Predicated region
        $region37: #{tpu_custom_call.1} parent=35 // pred_check
          %p258 = pneg %p69
        $region38: #{tpu_custom_call.1} parent=35 // pred_check_branch
          %260 = sbr.rel (%p258) target = $region40
        $region39: #{tpu_custom_call.1} parent=35 // pred_region
          %261 = dma.done %s254, 512
        $region40: #{tpu_custom_call.1} parent=35 // pred_fallthru
          _
        // Predicated region
        $region41: #{tpu_custom_call.1} parent=35 // pred_check
          %p262 = pneg %p95
        $region42: #{tpu_custom_call.1} parent=35 // pred_check_branch
          %264 = sbr.rel (%p262) target = $region44
        $region43: #{tpu_custom_call.1} parent=35 // pred_region
          %265 = dma.done [#allocation9], 5120
        $region44: #{tpu_custom_call.1} parent=35 // pred_fallthru
          _
        %s266 = sand.u32 %s56, 1
        %s267 = scalar_lea.sflag [#allocation6], %s266
        %s268 = sand.u32 %s56, 1
        %s269 = smul.addr %s268, 32
        %s270 = scalar_lea.vmem [#allocation5], %s269
        %p271 = pneg %p69
        %p272 = pneg %p66
        %p273 = pneg %p95
        %p274 = pneg %p92
        %p275 = scmp.lt.s32.totalorder %s33, 0
        %s276 = scalar_select %p275, %s33, 0
        %s277 = scalar_lea.vmem %s3, %s276
        %p278 = pneg %p121
        %p279 = pneg %p118
        %p280 = scmp.lt.s32.totalorder %s33, 0
        %s281 = scalar_select %p280, %s33, 0
        %s282 = scalar_lea.vmem %s4, %s281
        %p283 = pneg %p147
        %p284 = pneg %p144
        %p285 = pneg %p177
        %p286 = pneg %p174
        %s287 = sand.u32 %s164, 1
        %s288 = scalar_lea.sflag [#allocation7], %s287
        %s289 = sand.u32 %s164, 1
        %s290 = smul.addr %s289, 32
        %s291 = scalar_lea.vmem [#allocation10], %s290
        %s292 = smul.u32 8, %s34
        %p293 = scmp.lt.s32.totalorder %s33, 0
        %s294 = scalar_select %p293, %s33, 0
        %s295 = scalar_lea.vmem %s3, %s294
        %p296 = scmp.lt.s32.totalorder %s33, 0
        %s297 = scalar_select %p296, %s33, 0
        %s298 = scalar_lea.vmem %s4, %s297
        %s299 = smul.u32 8, %s34
        %p301 = scmp.eq.s32.totalorder %s34, 0
        // Predicated region
        $region45: #{tpu_custom_call.1} parent=35 // pred_check
          %p302 = pneg %p301
        $region46: #{tpu_custom_call.1} parent=35 // pred_check_branch
          %304 = sbr.rel (%p302) target = $region48
        $region47: #{tpu_custom_call.1} parent=35 // pred_region
          %s305 = smul.u32 %s32, 128
          %s306 = sld [smem:[#allocation4 + %s305]]
          %v307 = vld [vmem:[#allocation8] sm:$0xf]
          %v308 = vld [vmem:[#allocation8 + $0x4] sm:$0xf]
          %v309 = vld [vmem:[#allocation8 + $0x8] sm:$0xf]
          %v310 = vld [vmem:[#allocation8 + $0xc] sm:$0xf]
          %v311 = vld [vmem:[#allocation8 + $0x10] sm:$0xf]
          %v312 = vld [vmem:[#allocation8 + $0x14] sm:$0xf]
          %v313 = vld [vmem:[#allocation8 + $0x18] sm:$0xf]
          %v314 = vld [vmem:[#allocation8 + $0x1c] sm:$0xf]
          %v315 = vld [vmem:[#allocation8 + $0x20] sm:$0xf]
          %v316 = vld [vmem:[#allocation8 + $0x24] sm:$0xf]
          %v317 = vld [vmem:[#allocation8 + $0x28] sm:$0xf]
          %v318 = vld [vmem:[#allocation8 + $0x2c] sm:$0xf]
          %v319 = vld [vmem:[#allocation8 + $0x30] sm:$0xf]
          %v320 = vld [vmem:[#allocation8 + $0x34] sm:$0xf]
          %v321 = vld [vmem:[#allocation8 + $0x38] sm:$0xf]
          %v322 = vld [vmem:[#allocation8 + $0x3c] sm:$0xf]
          %v323 = vunpack.c.l.bf16 %v307
          %v324 = vunpack.c.l.bf16 %v308
          %v325 = vunpack.c.l.bf16 %v309
          %v326 = vunpack.c.l.bf16 %v310
          %v327 = vunpack.c.l.bf16 %v311
          %v328 = vunpack.c.l.bf16 %v312
          %v329 = vunpack.c.l.bf16 %v313
          %v330 = vunpack.c.l.bf16 %v314
          %v331 = vunpack.c.l.bf16 %v315
          %v332 = vunpack.c.l.bf16 %v316
          %v333 = vunpack.c.l.bf16 %v317
          %v334 = vunpack.c.l.bf16 %v318
          %v335 = vunpack.c.l.bf16 %v319
          %v336 = vunpack.c.l.bf16 %v320
          %v337 = vunpack.c.l.bf16 %v321
          %v338 = vunpack.c.l.bf16 %v322
          %v339 = vstv %s306
          %v340 = vmul.f32 %v339, %v323
          %v341 = vmul.f32 %v339, %v324
          %v342 = vmul.f32 %v339, %v325
          %v343 = vmul.f32 %v339, %v326
          %v344 = vmul.f32 %v339, %v327
          %v345 = vmul.f32 %v339, %v328
          %v346 = vmul.f32 %v339, %v329
          %v347 = vmul.f32 %v339, %v330
          %v348 = vmul.f32 %v339, %v331
          %v349 = vmul.f32 %v339, %v332
          %v350 = vmul.f32 %v339, %v333
          %v351 = vmul.f32 %v339, %v334
          %v352 = vmul.f32 %v339, %v335
          %v353 = vmul.f32 %v339, %v336
          %v354 = vmul.f32 %v339, %v337
          %v355 = vmul.f32 %v339, %v338
          %s356 = sadd.s32 %s305, 1
          %s357 = sld [smem:[#allocation4 + %s356]]
          %s358 = scalar_lea.vmem [#allocation8], 64
          %v359 = vld [vmem:[%s358] sm:$0xf]
          %v360 = vld [vmem:[%s358 + $0x4] sm:$0xf]
          %v361 = vld [vmem:[%s358 + $0x8] sm:$0xf]
          %v362 = vld [vmem:[%s358 + $0xc] sm:$0xf]
          %v363 = vld [vmem:[%s358 + $0x10] sm:$0xf]
          %v364 = vld [vmem:[%s358 + $0x14] sm:$0xf]
          %v365 = vld [vmem:[%s358 + $0x18] sm:$0xf]
          %v366 = vld [vmem:[%s358 + $0x1c] sm:$0xf]
          %v367 = vld [vmem:[%s358 + $0x20] sm:$0xf]
          %v368 = vld [vmem:[%s358 + $0x24] sm:$0xf]
          %v369 = vld [vmem:[%s358 + $0x28] sm:$0xf]
          %v370 = vld [vmem:[%s358 + $0x2c] sm:$0xf]
          %v371 = vld [vmem:[%s358 + $0x30] sm:$0xf]
          %v372 = vld [vmem:[%s358 + $0x34] sm:$0xf]
          %v373 = vld [vmem:[%s358 + $0x38] sm:$0xf]
          %v374 = vld [vmem:[%s358 + $0x3c] sm:$0xf]
          %v375 = vunpack.c.l.bf16 %v359
          %v376 = vunpack.c.l.bf16 %v360
          %v377 = vunpack.c.l.bf16 %v361
          %v378 = vunpack.c.l.bf16 %v362
          %v379 = vunpack.c.l.bf16 %v363
          %v380 = vunpack.c.l.bf16 %v364
          %v381 = vunpack.c.l.bf16 %v365
          %v382 = vunpack.c.l.bf16 %v366
          %v383 = vunpack.c.l.bf16 %v367
          %v384 = vunpack.c.l.bf16 %v368
          %v385 = vunpack.c.l.bf16 %v369
          %v386 = vunpack.c.l.bf16 %v370
          %v387 = vunpack.c.l.bf16 %v371
          %v388 = vunpack.c.l.bf16 %v372
          %v389 = vunpack.c.l.bf16 %v373
          %v390 = vunpack.c.l.bf16 %v374
          %v391 = vstv %s357
          %v392 = vmul.f32 %v391, %v375
          %v393 = vmul.f32 %v391, %v376
          %v394 = vmul.f32 %v391, %v377
          %v395 = vmul.f32 %v391, %v378
          %v396 = vmul.f32 %v391, %v379
          %v397 = vmul.f32 %v391, %v380
          %v398 = vmul.f32 %v391, %v381
          %v399 = vmul.f32 %v391, %v382
          %v400 = vmul.f32 %v391, %v383
          %v401 = vmul.f32 %v391, %v384
          %v402 = vmul.f32 %v391, %v385
          %v403 = vmul.f32 %v391, %v386
          %v404 = vmul.f32 %v391, %v387
          %v405 = vmul.f32 %v391, %v388
          %v406 = vmul.f32 %v391, %v389
          %v407 = vmul.f32 %v391, %v390
          %v408 = vadd.f32 %v340, %v392
          %v409 = vadd.f32 %v341, %v393
          %v410 = vadd.f32 %v342, %v394
          %v411 = vadd.f32 %v343, %v395
          %v412 = vadd.f32 %v344, %v396
          %v413 = vadd.f32 %v345, %v397
          %v414 = vadd.f32 %v346, %v398
          %v415 = vadd.f32 %v347, %v399
          %v416 = vadd.f32 %v348, %v400
          %v417 = vadd.f32 %v349, %v401
          %v418 = vadd.f32 %v350, %v402
          %v419 = vadd.f32 %v351, %v403
          %v420 = vadd.f32 %v352, %v404
          %v421 = vadd.f32 %v353, %v405
          %v422 = vadd.f32 %v354, %v406
          %v423 = vadd.f32 %v355, %v407
          %s424 = sadd.s32 %s305, 2
          %s425 = sld [smem:[#allocation4 + %s424]]
          %s426 = scalar_lea.vmem [#allocation8], 128
          %v427 = vld [vmem:[%s426] sm:$0xf]
          %v428 = vld [vmem:[%s426 + $0x4] sm:$0xf]
          %v429 = vld [vmem:[%s426 + $0x8] sm:$0xf]
          %v430 = vld [vmem:[%s426 + $0xc] sm:$0xf]
          %v431 = vld [vmem:[%s426 + $0x10] sm:$0xf]
          %v432 = vld [vmem:[%s426 + $0x14] sm:$0xf]
          %v433 = vld [vmem:[%s426 + $0x18] sm:$0xf]
          %v434 = vld [vmem:[%s426 + $0x1c] sm:$0xf]
          %v435 = vld [vmem:[%s426 + $0x20] sm:$0xf]
          %v436 = vld [vmem:[%s426 + $0x24] sm:$0xf]
          %v437 = vld [vmem:[%s426 + $0x28] sm:$0xf]
          %v438 = vld [vmem:[%s426 + $0x2c] sm:$0xf]
          %v439 = vld [vmem:[%s426 + $0x30] sm:$0xf]
          %v440 = vld [vmem:[%s426 + $0x34] sm:$0xf]
          %v441 = vld [vmem:[%s426 + $0x38] sm:$0xf]
          %v442 = vld [vmem:[%s426 + $0x3c] sm:$0xf]
          %v443 = vunpack.c.l.bf16 %v427
          %v444 = vunpack.c.l.bf16 %v428
          %v445 = vunpack.c.l.bf16 %v429
          %v446 = vunpack.c.l.bf16 %v430
          %v447 = vunpack.c.l.bf16 %v431
          %v448 = vunpack.c.l.bf16 %v432
          %v449 = vunpack.c.l.bf16 %v433
          %v450 = vunpack.c.l.bf16 %v434
          %v451 = vunpack.c.l.bf16 %v435
          %v452 = vunpack.c.l.bf16 %v436
          %v453 = vunpack.c.l.bf16 %v437
          %v454 = vunpack.c.l.bf16 %v438
          %v455 = vunpack.c.l.bf16 %v439
          %v456 = vunpack.c.l.bf16 %v440
          %v457 = vunpack.c.l.bf16 %v441
          %v458 = vunpack.c.l.bf16 %v442
          %v459 = vstv %s425
          %v460 = vmul.f32 %v459, %v443
          %v461 = vmul.f32 %v459, %v444
          %v462 = vmul.f32 %v459, %v445
          %v463 = vmul.f32 %v459, %v446
          %v464 = vmul.f32 %v459, %v447
          %v465 = vmul.f32 %v459, %v448
          %v466 = vmul.f32 %v459, %v449
          %v467 = vmul.f32 %v459, %v450
          %v468 = vmul.f32 %v459, %v451
          %v469 = vmul.f32 %v459, %v452
          %v470 = vmul.f32 %v459, %v453
          %v471 = vmul.f32 %v459, %v454
          %v472 = vmul.f32 %v459, %v455
          %v473 = vmul.f32 %v459, %v456
          %v474 = vmul.f32 %v459, %v457
          %v475 = vmul.f32 %v459, %v458
          %v476 = vadd.f32 %v408, %v460
          %v477 = vadd.f32 %v409, %v461
          %v478 = vadd.f32 %v410, %v462
          %v479 = vadd.f32 %v411, %v463
          %v480 = vadd.f32 %v412, %v464
          %v481 = vadd.f32 %v413, %v465
          %v482 = vadd.f32 %v414, %v466
          %v483 = vadd.f32 %v415, %v467
          %v484 = vadd.f32 %v416, %v468
          %v485 = vadd.f32 %v417, %v469
          %v486 = vadd.f32 %v418, %v470
          %v487 = vadd.f32 %v419, %v471
          %v488 = vadd.f32 %v420, %v472
          %v489 = vadd.f32 %v421, %v473
          %v490 = vadd.f32 %v422, %v474
          %v491 = vadd.f32 %v423, %v475
          %s492 = sadd.s32 %s305, 3
          %s493 = sld [smem:[#allocation4 + %s492]]
          %s494 = scalar_lea.vmem [#allocation8], 192
          %v495 = vld [vmem:[%s494] sm:$0xf]
          %v496 = vld [vmem:[%s494 + $0x4] sm:$0xf]
          %v497 = vld [vmem:[%s494 + $0x8] sm:$0xf]
          %v498 = vld [vmem:[%s494 + $0xc] sm:$0xf]
          %v499 = vld [vmem:[%s494 + $0x10] sm:$0xf]
          %v500 = vld [vmem:[%s494 + $0x14] sm:$0xf]
          %v501 = vld [vmem:[%s494 + $0x18] sm:$0xf]
          %v502 = vld [vmem:[%s494 + $0x1c] sm:$0xf]
          %v503 = vld [vmem:[%s494 + $0x20] sm:$0xf]
          %v504 = vld [vmem:[%s494 + $0x24] sm:$0xf]
          %v505 = vld [vmem:[%s494 + $0x28] sm:$0xf]
          %v506 = vld [vmem:[%s494 + $0x2c] sm:$0xf]
          %v507 = vld [vmem:[%s494 + $0x30] sm:$0xf]
          %v508 = vld [vmem:[%s494 + $0x34] sm:$0xf]
          %v509 = vld [vmem:[%s494 + $0x38] sm:$0xf]
          %v510 = vld [vmem:[%s494 + $0x3c] sm:$0xf]
          %v511 = vunpack.c.l.bf16 %v495
          %v512 = vunpack.c.l.bf16 %v496
          %v513 = vunpack.c.l.bf16 %v497
          %v514 = vunpack.c.l.bf16 %v498
          %v515 = vunpack.c.l.bf16 %v499
          %v516 = vunpack.c.l.bf16 %v500
          %v517 = vunpack.c.l.bf16 %v501
          %v518 = vunpack.c.l.bf16 %v502
          %v519 = vunpack.c.l.bf16 %v503
          %v520 = vunpack.c.l.bf16 %v504
          %v521 = vunpack.c.l.bf16 %v505
          %v522 = vunpack.c.l.bf16 %v506
          %v523 = vunpack.c.l.bf16 %v507
          %v524 = vunpack.c.l.bf16 %v508
          %v525 = vunpack.c.l.bf16 %v509
          %v526 = vunpack.c.l.bf16 %v510
          %v527 = vstv %s493
          %v528 = vmul.f32 %v527, %v511
          %v529 = vmul.f32 %v527, %v512
          %v530 = vmul.f32 %v527, %v513
          %v531 = vmul.f32 %v527, %v514
          %v532 = vmul.f32 %v527, %v515
          %v533 = vmul.f32 %v527, %v516
          %v534 = vmul.f32 %v527, %v517
          %v535 = vmul.f32 %v527, %v518
          %v536 = vmul.f32 %v527, %v519
          %v537 = vmul.f32 %v527, %v520
          %v538 = vmul.f32 %v527, %v521
          %v539 = vmul.f32 %v527, %v522
          %v540 = vmul.f32 %v527, %v523
          %v541 = vmul.f32 %v527, %v524
          %v542 = vmul.f32 %v527, %v525
          %v543 = vmul.f32 %v527, %v526
          %v544 = vadd.f32 %v476, %v528
          %v545 = vadd.f32 %v477, %v529
          %v546 = vadd.f32 %v478, %v530
          %v547 = vadd.f32 %v479, %v531
          %v548 = vadd.f32 %v480, %v532
          %v549 = vadd.f32 %v481, %v533
          %v550 = vadd.f32 %v482, %v534
          %v551 = vadd.f32 %v483, %v535
          %v552 = vadd.f32 %v484, %v536
          %v553 = vadd.f32 %v485, %v537
          %v554 = vadd.f32 %v486, %v538
          %v555 = vadd.f32 %v487, %v539
          %v556 = vadd.f32 %v488, %v540
          %v557 = vadd.f32 %v489, %v541
          %v558 = vadd.f32 %v490, %v542
          %v559 = vadd.f32 %v491, %v543
          %s560 = sadd.s32 %s305, 4
          %s561 = sld [smem:[#allocation4 + %s560]]
          %s562 = scalar_lea.vmem [#allocation8], 256
          %v563 = vld [vmem:[%s562] sm:$0xf]
          %v564 = vld [vmem:[%s562 + $0x4] sm:$0xf]
          %v565 = vld [vmem:[%s562 + $0x8] sm:$0xf]
          %v566 = vld [vmem:[%s562 + $0xc] sm:$0xf]
          %v567 = vld [vmem:[%s562 + $0x10] sm:$0xf]
          %v568 = vld [vmem:[%s562 + $0x14] sm:$0xf]
          %v569 = vld [vmem:[%s562 + $0x18] sm:$0xf]
          %v570 = vld [vmem:[%s562 + $0x1c] sm:$0xf]
          %v571 = vld [vmem:[%s562 + $0x20] sm:$0xf]
          %v572 = vld [vmem:[%s562 + $0x24] sm:$0xf]
          %v573 = vld [vmem:[%s562 + $0x28] sm:$0xf]
          %v574 = vld [vmem:[%s562 + $0x2c] sm:$0xf]
          %v575 = vld [vmem:[%s562 + $0x30] sm:$0xf]
          %v576 = vld [vmem:[%s562 + $0x34] sm:$0xf]
          %v577 = vld [vmem:[%s562 + $0x38] sm:$0xf]
          %v578 = vld [vmem:[%s562 + $0x3c] sm:$0xf]
          %v579 = vunpack.c.l.bf16 %v563
          %v580 = vunpack.c.l.bf16 %v564
          %v581 = vunpack.c.l.bf16 %v565
          %v582 = vunpack.c.l.bf16 %v566
          %v583 = vunpack.c.l.bf16 %v567
          %v584 = vunpack.c.l.bf16 %v568
          %v585 = vunpack.c.l.bf16 %v569
          %v586 = vunpack.c.l.bf16 %v570
          %v587 = vunpack.c.l.bf16 %v571
          %v588 = vunpack.c.l.bf16 %v572
          %v589 = vunpack.c.l.bf16 %v573
          %v590 = vunpack.c.l.bf16 %v574
          %v591 = vunpack.c.l.bf16 %v575
          %v592 = vunpack.c.l.bf16 %v576
          %v593 = vunpack.c.l.bf16 %v577
          %v594 = vunpack.c.l.bf16 %v578
          %v595 = vstv %s561
          %v596 = vmul.f32 %v595, %v579
          %v597 = vmul.f32 %v595, %v580
          %v598 = vmul.f32 %v595, %v581
          %v599 = vmul.f32 %v595, %v582
          %v600 = vmul.f32 %v595, %v583
          %v601 = vmul.f32 %v595, %v584
          %v602 = vmul.f32 %v595, %v585
          %v603 = vmul.f32 %v595, %v586
          %v604 = vmul.f32 %v595, %v587
          %v605 = vmul.f32 %v595, %v588
          %v606 = vmul.f32 %v595, %v589
          %v607 = vmul.f32 %v595, %v590
          %v608 = vmul.f32 %v595, %v591
          %v609 = vmul.f32 %v595, %v592
          %v610 = vmul.f32 %v595, %v593
          %v611 = vmul.f32 %v595, %v594
          %v612 = vadd.f32 %v544, %v596
          %v613 = vadd.f32 %v545, %v597
          %v614 = vadd.f32 %v546, %v598
          %v615 = vadd.f32 %v547, %v599
          %v616 = vadd.f32 %v548, %v600
          %v617 = vadd.f32 %v549, %v601
          %v618 = vadd.f32 %v550, %v602
          %v619 = vadd.f32 %v551, %v603
          %v620 = vadd.f32 %v552, %v604
          %v621 = vadd.f32 %v553, %v605
          %v622 = vadd.f32 %v554, %v606
          %v623 = vadd.f32 %v555, %v607
          %v624 = vadd.f32 %v556, %v608
          %v625 = vadd.f32 %v557, %v609
          %v626 = vadd.f32 %v558, %v610
          %v627 = vadd.f32 %v559, %v611
          %v628 = vpack.c.bf16 %v613, %v612
          %v629 = vpack.c.bf16 %v615, %v614
          %v630 = vpack.c.bf16 %v617, %v616
          %v631 = vpack.c.bf16 %v619, %v618
          %v632 = vpack.c.bf16 %v621, %v620
          %v633 = vpack.c.bf16 %v623, %v622
          %v634 = vpack.c.bf16 %v625, %v624
          %v635 = vpack.c.bf16 %v627, %v626
          %636 = vst [vmem:[#allocation2] sm:$0xff] %v628
          %637 = vst [vmem:[#allocation2 + $0x8] sm:$0xff] %v629
          %638 = vst [vmem:[#allocation2 + $0x10] sm:$0xff] %v630
          %639 = vst [vmem:[#allocation2 + $0x18] sm:$0xff] %v631
          %640 = vst [vmem:[#allocation2 + $0x20] sm:$0xff] %v632
          %641 = vst [vmem:[#allocation2 + $0x28] sm:$0xff] %v633
          %642 = vst [vmem:[#allocation2 + $0x30] sm:$0xff] %v634
          %643 = vst [vmem:[#allocation2 + $0x38] sm:$0xff] %v635
        $region48: #{tpu_custom_call.1} parent=35 // pred_fallthru
          _
        %v644 = vld [vmem:[%s257] sm:$0xf]
        %v645 = vld [vmem:[%s257 + $0x4] sm:$0xf]
        %v646 = vld [vmem:[%s257 + $0x8] sm:$0xf]
        %v647 = vld [vmem:[%s257 + $0xc] sm:$0xf]
        %v648 = vld [vmem:[%s257 + $0x10] sm:$0xf]
        %v649 = vld [vmem:[%s257 + $0x14] sm:$0xf]
        %v650 = vld [vmem:[%s257 + $0x18] sm:$0xf]
        %v651 = vld [vmem:[%s257 + $0x1c] sm:$0xf]
        %v652 = vld [vmem:[#allocation2] sm:$0xff]
        %v653 = vld [vmem:[#allocation2 + $0x8] sm:$0xff]
        %v654 = vld [vmem:[#allocation2 + $0x10] sm:$0xff]
        %v655 = vld [vmem:[#allocation2 + $0x18] sm:$0xff]
        %v656 = vld [vmem:[#allocation2 + $0x20] sm:$0xff]
        %v657 = vld [vmem:[#allocation2 + $0x28] sm:$0xff]
        %v658 = vld [vmem:[#allocation2 + $0x30] sm:$0xff]
        %v659 = vld [vmem:[#allocation2 + $0x38] sm:$0xff]
        %v668 = vunpack.c.l.b16 %v644
        %v669 = vunpack.c.l.b16 %v645
        %v670 = vunpack.c.l.b16 %v646
        %v671 = vunpack.c.l.b16 %v647
        %v672 = vunpack.c.l.b16 %v648
        %v673 = vunpack.c.l.b16 %v649
        %v674 = vunpack.c.l.b16 %v650
        %v675 = vunpack.c.l.b16 %v651
        %v676 = vpack.c.b16 %v669, %v668
        %v677 = vpack.c.b16 %v671, %v670
        %v678 = vpack.c.b16 %v673, %v672
        %v679 = vpack.c.b16 %v675, %v674
        %684 = vmatprep.subr.bf16.mxu0 0
        %685 = vmatpush1.bf16.msra.mxu0 %v652
        %686 = vmatprep.subr.bf16.mxu0 0
        %687 = vmatpush1.bf16.msra.mxu0 %v653
        %688 = vmatprep.subr.bf16.mxu0 0
        %689 = vmatpush1.bf16.msra.mxu0 %v654
        %690 = vmatprep.subr.bf16.mxu0 0
        %691 = vmatpush1.bf16.msra.mxu0 %v655
        %692 = vmatprep.subr.bf16.mxu0 0
        %693 = vmatpush1.bf16.msra.mxu0 %v656
        %694 = vmatprep.subr.bf16.mxu0 0
        %695 = vmatpush1.bf16.msra.mxu0 %v657
        %696 = vmatprep.subr.bf16.mxu0 0
        %697 = vmatpush1.bf16.msra.mxu0 %v658
        %698 = vmatprep.subr.bf16.mxu0 0
        %699 = vmatpush1.bf16.msra.mxu0 %v659
        %700 = vmatprep.subr.bf16.mxu0 0
        %701 = vmatpush1.bf16.msra.mxu0 0
        %702 = vmatprep.subr.bf16.mxu0 0
        %703 = vmatpush1.bf16.msra.mxu0 0
        %704 = vmatprep.subr.bf16.mxu0 0
        %705 = vmatpush1.bf16.msra.mxu0 0
        %706 = vmatprep.subr.bf16.mxu0 0
        %707 = vmatpush1.bf16.msra.mxu0 0
        %708 = vmatprep.subr.bf16.mxu0 0
        %709 = vmatpush1.bf16.msra.mxu0 0
        %710 = vmatprep.subr.bf16.mxu0 0
        %711 = vmatpush1.bf16.msra.mxu0 0
        %712 = vmatprep.subr.bf16.mxu0 0
        %713 = vmatpush1.bf16.msra.mxu0 0
        %714 = vmatprep.subr.bf16.mxu0 0
        %715 = vmatpush1.bf16.msra.mxu0 0
        %716 = vmatprep.mubr.bf16.mxu0 0
        %717 = vmatmul.mubr.bf16.gmra.mrb[0].mxu0 %v676
        %v718 = vpop.f32.mrb[0].mxu0
        %v719 = vadd.f32 0.0, %v718
        %v720 = vpop.f32.mrb[0].mxu0
        %v721 = vpop.f32.mrb[0].mxu0
        %v722 = vadd.f32 0.0, %v721
        %v723 = vpop.f32.mrb[0].mxu0
        %724 = vmatprep.mubr.bf16.mxu0 0
        %725 = vmatmul.mubr.bf16.gmra.mrb[0].mxu0 %v677
        %v726 = vpop.f32.mrb[0].mxu0
        %v727 = vadd.f32 0.0, %v726
        %v728 = vpop.f32.mrb[0].mxu0
        %v729 = vpop.f32.mrb[0].mxu0
        %v730 = vadd.f32 0.0, %v729
        %v731 = vpop.f32.mrb[0].mxu0
        %732 = vmatprep.mubr.bf16.mxu0 0
        %733 = vmatmul.mubr.bf16.gmra.mrb[0].mxu0 %v678
        %v734 = vpop.f32.mrb[0].mxu0
        %v735 = vadd.f32 0.0, %v734
        %v736 = vpop.f32.mrb[0].mxu0
        %v737 = vpop.f32.mrb[0].mxu0
        %v738 = vadd.f32 0.0, %v737
        %v739 = vpop.f32.mrb[0].mxu0
        %740 = vmatprep.mubr.bf16.mxu0 0
        %741 = vmatmul.mubr.bf16.gmra.mrb[0].mxu0 %v679
        %v742 = vpop.f32.mrb[0].mxu0
        %v743 = vadd.f32 0.0, %v742
        %v744 = vpop.f32.mrb[0].mxu0
        %v745 = vpop.f32.mrb[0].mxu0
        %v746 = vadd.f32 0.0, %v745
        %v747 = vpop.f32.mrb[0].mxu0
        %748 = vdwg.mxu0
        %v749 = vld [vmem:[%s295] sm:$0x1]
        %v751 = vlaneseq
        %v752 = vshrl.u32 %v751, 7
        %v753 = vsub.s32 0, %v752
        %v754 = vrot.slane %v749, %v753
        %v756 = vmul.f32 %v719, %v754
        %v757 = vmul.f32 %v722, %v754
        %v758 = vmul.f32 %v727, %v754
        %v759 = vmul.f32 %v730, %v754
        %v760 = vmul.f32 %v735, %v754
        %v761 = vmul.f32 %v738, %v754
        %v762 = vmul.f32 %v743, %v754
        %v763 = vmul.f32 %v746, %v754
        %v764 = vld [vmem:[%s298] sm:$0x1]
        %v766 = vlaneseq
        %v767 = vshrl.u32 %v766, 7
        %v768 = vsub.s32 0, %v767
        %v769 = vrot.slane %v764, %v768
        %v771 = vadd.f32 %v756, %v769
        %v772 = vadd.f32 %v757, %v769
        %v773 = vadd.f32 %v758, %v769
        %v774 = vadd.f32 %v759, %v769
        %v775 = vadd.f32 %v760, %v769
        %v776 = vadd.f32 %v761, %v769
        %v777 = vadd.f32 %v762, %v769
        %v778 = vadd.f32 %v763, %v769
        %v779 = vmax.f32 %v771, 0.0
        %v780 = vmax.f32 %v772, 0.0
        %v781 = vmax.f32 %v773, 0.0
        %v782 = vmax.f32 %v774, 0.0
        %v783 = vmax.f32 %v775, 0.0
        %v784 = vmax.f32 %v776, 0.0
        %v785 = vmax.f32 %v777, 0.0
        %v786 = vmax.f32 %v778, 0.0
        %v787 = vpack.c.bf16 %v780, %v779
        %v788 = vpack.c.bf16 %v782, %v781
        %v789 = vpack.c.bf16 %v784, %v783
        %v790 = vpack.c.bf16 %v786, %v785
        %v795 = vunpack.c.l.b16 %v787
        %v796 = vunpack.c.h.b16 %v787
        %v797 = vunpack.c.l.b16 %v788
        %v798 = vunpack.c.h.b16 %v788
        %v799 = vunpack.c.l.b16 %v789
        %v800 = vunpack.c.h.b16 %v789
        %v801 = vunpack.c.l.b16 %v790
        %v802 = vunpack.c.h.b16 %v790
        %v803 = vpack.c.b16 %v795, %v795
        %v804 = vpack.c.b16 %v796, %v796
        %v805 = vpack.c.b16 %v797, %v797
        %v806 = vpack.c.b16 %v798, %v798
        %v807 = vpack.c.b16 %v799, %v799
        %v808 = vpack.c.b16 %v800, %v800
        %v809 = vpack.c.b16 %v801, %v801
        %v810 = vpack.c.b16 %v802, %v802
        %819 = vst [vmem:[%s291] sm:$0xf] %v803
        %820 = vst [vmem:[%s291 + $0x4] sm:$0xf] %v804
        %821 = vst [vmem:[%s291 + $0x8] sm:$0xf] %v805
        %822 = vst [vmem:[%s291 + $0xc] sm:$0xf] %v806
        %823 = vst [vmem:[%s291 + $0x10] sm:$0xf] %v807
        %824 = vst [vmem:[%s291 + $0x14] sm:$0xf] %v808
        %825 = vst [vmem:[%s291 + $0x18] sm:$0xf] %v809
        %826 = vst [vmem:[%s291 + $0x1c] sm:$0xf] %v810
        %s827 = sand.u32 %s164, 1
        %s828 = scalar_lea.sflag [#allocation7], %s827
        %s829 = sand.u32 %s164, 1
        %s830 = smul.addr %s829, 32
        %s831 = scalar_lea.vmem [#allocation10], %s830
        // Predicated region
        $region49: #{tpu_custom_call.1} parent=35 // pred_check
          %p832 = pneg %p174
        $region50: #{tpu_custom_call.1} parent=35 // pred_check_branch
          %834 = sbr.rel (%p832) target = $region52
        $region51: #{tpu_custom_call.1} parent=35 // pred_region
          %s835 = smul.u32 8, %s34
          %s837 = ssub.s32 512, 512
          %838 = vsyncadd %s828, %s837
          %s839 = sadd.s32 %s33, %s835
          %s840 = smul.addr %s32, 8
          %s841 = sadd.s32 %s839, %s840
          %s842 = smul.addr %s841, 64
          %s843 = scalar_lea.hbm %s5, %s842
          %s844 = sshll.u32 %s831, 4
          %s845 = int_to_ptr.vmem [resolvable:$true] %s844
          %850 = dma.vmem_to_hbm [thread:$0]  %s845, 512, %s843, %s828, 64, 64, 4
        $region52: #{tpu_custom_call.1} parent=35 // pred_fallthru
          _
      $region36: #{tpu_custom_call.1} parent=5 // pred_fallthru
        _
      %p851 = scmp.le.s32.totalorder 2, %s22
      // Predicated region
      $region53: #{tpu_custom_call.1} parent=5 // pred_check
        %p852 = pneg %p851
      $region54: #{tpu_custom_call.1} parent=5 // pred_check_branch
        %854 = sbr.rel (%p852) target = $region56
      $region55: #{tpu_custom_call.1} parent=5 // pred_region
        %s855 = ssub.s32 %s22, 2
        // Predicated region
        $region57: #{tpu_custom_call.1} parent=55 // pred_check
          %p856 = pneg %p180
        $region58: #{tpu_custom_call.1} parent=55 // pred_check_branch
          %858 = sbr.rel (%p856) target = $region60
        $region59: #{tpu_custom_call.1} parent=55 // pred_region
          %s859 = sand.u32 %s165, 1
          %s860 = scalar_lea.sflag [#allocation7], %s859
          %s861 = sand.u32 %s165, 1
          %s862 = smul.addr %s861, 32
          %s863 = scalar_lea.vmem [#allocation10], %s862
          %864 = dma.done %s860, 512
        $region60: #{tpu_custom_call.1} parent=55 // pred_fallthru
          _
      $region56: #{tpu_custom_call.1} parent=5 // pred_fallthru
        _
    $region6: #{tpu_custom_call.1} parent=1 // loop_footer
      %s26 = sadd.s32 1, %s22
    $region7: #{tpu_custom_call.1} parent=1 // loop_footer_branch
      %21 = sbr.rel target = $region3
    $region8: #{tpu_custom_call.1} parent=1 // loop_exit
      _
    %865 = vsyncpa [#allocation6], 1
    %s866 = scalar_lea.sflag [#allocation6], 1
    %867 = vsyncpa %s866, 1
    %868 = vsyncpa [#allocation9], 1
    %869 = vsyncpa [#allocation7], 1
    %s870 = scalar_lea.sflag [#allocation7], 1
    %871 = vsyncpa %s870, 1

</llo_original>
